<compile_context>
chip_gen: v7x
topology: tpu7x:2x2x1
jax: 0.10.0
libtpu: 0.0.40
codegen_flags: <defaults>
</compile_context>

<pallas_src>
import functools

import jax
import jax.numpy as jnp
from jax.experimental import pallas as pl
from jax.experimental.pallas import tpu as pltpu


_FEAT_BLOCK_BYTES = 4 * 1024 * 1024   # ~4 MiB of feat per grid step (x2 for double buffering)


def _pick_groups_per_block(B, group_bytes, budget_bytes=_FEAT_BLOCK_BYTES):
    """Groups per grid step: sublane-aligned (multiple of 8) proper divisor of B that keeps
    the feat block near the byte budget; falls back to B (full-dim block, always legal)."""
    cands = [d for d in range(8, B, 8) if B % d == 0]
    fitting = [d for d in cands if d * group_bytes <= budget_bytes]
    if fitting:
        return max(fitting)
    if cands:
        return min(cands)
    return B


# -------------------------------------------------------------------------
# Kernel: one block-diagonal matmul per grid step
#   fp_big block: (TB, TB*C)  -- per-group projected filters on the block diagonal
#   feat  block:  (TB*C, HW)  -- TB groups of (C, HW) feature slabs, lane-dense
#   out   block:  (TB, HW)    -- TB score maps, sublane-full & lane-dense
# -------------------------------------------------------------------------
def _apply_filter_kernel(fpb_ref, feat_ref, o_ref):
    fpb = fpb_ref[...].astype(feat_ref.dtype)   # tiny cast; lets bf16 feat use native bf16 MXU
    o_ref[...] = jnp.dot(fpb, feat_ref[...], preferred_element_type=jnp.float32)


# -------------------------------------------------------------------------
# Wrapper
# -------------------------------------------------------------------------
def linear_filter_classifier_forward(feat, filt, params=None, project_filter=True):
    """feat: (nf, ns, C, H, W); filt: (ns, C, 1, 1) -> scores (nf, ns, H, W)."""
    nf, ns, C, H, W = feat.shape
    fns, fC, fH, fW = filt.shape
    assert fns == ns and fC == C
    if (fH, fW) != (1, 1):
        # TODO(synk): general fHxfW>1 grouped correlation (apply_filter) not implemented;
        # the transformer head in heads.py uses a 1x1 filter.
        raise NotImplementedError("only 1x1 filters are supported")

    HW = H * W
    B = nf * ns

    # ---- filter projection: loop-invariant, hoisted out of the kernel (tiny (ns,C) op) ----
    fp = filt.reshape(ns, C).astype(jnp.float32)
    if project_filter:
        w = params["linear_w"].astype(jnp.float32)     # (C, C); y = x @ W^T + b
        bias = params["linear_b"].astype(jnp.float32)  # (C,)
        fp = jnp.dot(fp, w.T, precision=jax.lax.Precision.HIGHEST) + bias

    # ---- pick groups per grid step ----
    TB = _pick_groups_per_block(B, C * HW * feat.dtype.itemsize)
    grid = (B // TB,)

    # ---- block-diagonal per-group filter matrix (B, TB*C), f32 (tiny vs. feat bytes) ----
    fp_groups = jnp.tile(fp, (nf, 1))                                    # (B, C): group g uses fp[g % ns]
    slot = (jnp.arange(B, dtype=jnp.int32) % TB)[:, None]                # (B, 1)
    col = jnp.arange(TB * C, dtype=jnp.int32)[None, :]                   # (1, TB*C)
    fp_big = jnp.where((col // C) == slot, jnp.tile(fp_groups, (1, TB)), 0.0)  # (B, TB*C) f32

    # ---- feat as a lane-dense 2-D slab (free view reshape of contiguous NCHW) ----
    feat2 = feat.reshape(B * C, HW)
    # NOTE: if HW is not a multiple of 128 the full-dim last axis is still a legal block,
    # just lane-padded; pad HW in this view if peak bandwidth on such shapes matters.

    scores = pl.pallas_call(
        _apply_filter_kernel,
        out_shape=jax.ShapeDtypeStruct((B, HW), jnp.float32),
        grid=grid,
        in_specs=[
            pl.BlockSpec((TB, TB * C), lambda i: (i, 0)),
            pl.BlockSpec((TB * C, HW), lambda i: (i, 0)),
        ],
        out_specs=pl.BlockSpec((TB, HW), lambda i: (i, 0)),
        compiler_params=pltpu.CompilerParams(dimension_semantics=("parallel",)),
    )(fp_big, feat2)

    # scores accumulate in f32; return in feat's dtype (matches the PyTorch head's behaviour)
    return scores.reshape(nf, ns, H, W).astype(feat.dtype)


# -------------------------------------------------------------------------
# Test
# -------------------------------------------------------------------------
if __name__ == "__main__":
    nf, ns, C, H, W = 2, 8, 32, 16, 16          # num_channels = 32; B = 16 -> 2 grid steps of 8 groups
    key = jax.random.PRNGKey(0)
    k_feat, k_filt, k_w, k_b = jax.random.split(key, 4)

    feat = jax.random.normal(k_feat, (nf, ns, C, H, W), jnp.float32)
    filt = jax.random.normal(k_filt, (ns, C, 1, 1), jnp.float32)
    params = {
        "linear_w": 0.1 * jax.random.normal(k_w, (C, C), jnp.float32),
        "linear_b": 0.1 * jax.random.normal(k_b, (C,), jnp.float32),
    }

    fwd = jax.jit(functools.partial(linear_filter_classifier_forward, project_filter=True))
    scores = jax.block_until_ready(fwd(feat, filt, params))
    assert scores.shape == (nf, ns, H, W), scores.shape
    assert bool(jnp.all(jnp.isfinite(scores)))

    # Pure-JAX reference: nn.Linear on channels, then grouped 1x1 conv (= channel dot product).
    fp_ref = (
        jnp.dot(filt.reshape(-1, C), params["linear_w"].T,
                precision=jax.lax.Precision.HIGHEST)
        + params["linear_b"]
    ).reshape(ns, C)
    ref = jnp.einsum("nschw,sc->nshw", feat, fp_ref,
                     precision=jax.lax.Precision.HIGHEST)
    err = float(jnp.max(jnp.abs(scores - ref)))
    # Documented tolerance: in-kernel MXU dot uses default (bf16-pass) precision vs fp32 ref.
    assert err < 5e-2, f"max abs err vs reference (f32 feat): {err}"

    # bf16 feature path: kernel reads feat in its native dtype (half the HBM bytes).
    scores_bf16 = jax.block_until_ready(fwd(feat.astype(jnp.bfloat16), filt, params))
    assert scores_bf16.shape == (nf, ns, H, W)
    err_bf16 = float(jnp.max(jnp.abs(scores_bf16.astype(jnp.float32) - ref)))
    assert err_bf16 < 2.5e-1, f"max abs err vs reference (bf16 feat): {err_bf16}"

    print("KERNEL_OK")
</pallas_src>

<mosaic_0001>
module attributes {stable_mosaic.version = 11 : i64} {
  func.func @_apply_filter_kernel(%arg0: i32, %arg1: memref<8x256xf32, #tpu.memory_space<vmem>>, %arg2: memref<256x256xf32, #tpu.memory_space<vmem>>, %arg3: memref<8x256xf32, #tpu.memory_space<vmem>>) attributes {dimension_semantics = [#tpu.dimension_semantics<parallel>], iteration_bounds = array<i64: 2>, scalar_prefetch = 0 : i64, scratch_operands = 0 : i64, tpu.core_type = #tpu.core_type<tc>, window_params = [{transform_indices = @transform_0, window_bounds = array<i64: 8, 256>}, {transform_indices = @transform_1, window_bounds = array<i64: 256, 256>}, {transform_indices = @transform_2, window_bounds = array<i64: 8, 256>}]} {
    %c0 = arith.constant 0 : index
    %c0_0 = arith.constant 0 : index
    %0 = vector.load %arg1[%c0, %c0_0] : memref<8x256xf32, #tpu.memory_space<vmem>>, vector<8x256xf32>
    %c0_1 = arith.constant 0 : index
    %c0_2 = arith.constant 0 : index
    %1 = vector.load %arg2[%c0_1, %c0_2] : memref<256x256xf32, #tpu.memory_space<vmem>>, vector<256x256xf32>
    %cst = arith.constant dense<0.000000e+00> : vector<8x256xf32>
    %2 = tpu.matmul %0, %1, %cst {dimension_numbers = #tpu.dot_dimension_numbers<[1], [0], [0], [1], [0, 0, 1, 1], [], []>} : vector<8x256xf32>, vector<256x256xf32>, vector<8x256xf32> -> vector<8x256xf32>
    %c0_3 = arith.constant 0 : index
    %c0_4 = arith.constant 0 : index
    %3 = vector.load %arg3[%c0_3, %c0_4] : memref<8x256xf32, #tpu.memory_space<vmem>>, vector<8x256xf32>
    tpu.vector_store %arg3[%c0_3, %c0_4], %2 {strides = array<i32>} : memref<8x256xf32, #tpu.memory_space<vmem>>, vector<8x256xf32>,
    return
  }
  func.func @transform_0(%arg0: i32) -> (i32, i32) {
    %c0_i32 = arith.constant 0 : i32
    %c0_i32_0 = arith.constant 0 : i32
    return %arg0, %c0_i32 : i32, i32
  }
  func.func @transform_1(%arg0: i32) -> (i32, i32) {
    %c0_i32 = arith.constant 0 : i32
    %c0_i32_0 = arith.constant 0 : i32
    return %arg0, %c0_i32 : i32, i32
  }
  func.func @transform_2(%arg0: i32) -> (i32, i32) {
    %c0_i32 = arith.constant 0 : i32
    %c0_i32_0 = arith.constant 0 : i32
    return %arg0, %c0_i32 : i32, i32
  }
}

</mosaic_0001>

<llo_original>
// kernel: tile.17
$region0: #{tile.17}
  %s0 = inlined_call_operand.vmem [shape: f32[16,8,32], index: 0, kind: input, shape index: {}]
  %s1 = inlined_call_operand.vmem [shape: f32[16,256], index: 1, kind: output, shape index: {}]
  %v2 = vld [vmem:[%s0] ss:$4 sm:$0xff]
  %vm3 = vcmask 261120
  %4 = vst.msk [vmem:[%s1] ss:$8 sm:$0x3] %vm3, %v2
  %s5 = scalar_lea.vmem %s1, 4294967281
  %6 = vst.msk [vmem:[%s5] ss:$8 sm:$0xc] %vm3, %v2
  %s7 = scalar_lea.vmem %s1, 4294967266
  %8 = vst.msk [vmem:[%s7] ss:$8 sm:$0x30] %vm3, %v2
  %s9 = scalar_lea.vmem %s1, 4294967251
  %10 = vst.msk [vmem:[%s9] ss:$8 sm:$0xc0] %vm3, %v2
  %s11 = scalar_lea.vmem %s0, 32
  %v12 = vld [vmem:[%s11] ss:$4 sm:$0xff]
  %vm13 = vcmask 261120
  %s14 = scalar_lea.vmem %s1, 4
  %15 = vst.msk [vmem:[%s14] ss:$8 sm:$0x3] %vm13, %v12
  %s16 = scalar_lea.vmem %s1, 4294967285
  %17 = vst.msk [vmem:[%s16] ss:$8 sm:$0xc] %vm13, %v12
  %s18 = scalar_lea.vmem %s1, 4294967270
  %19 = vst.msk [vmem:[%s18] ss:$8 sm:$0x30] %vm13, %v12
  %s20 = scalar_lea.vmem %s1, 4294967255
  %21 = vst.msk [vmem:[%s20] ss:$8 sm:$0xc0] %vm13, %v12
  %s22 = scalar_lea.vmem %s0, 64
  %v23 = vld [vmem:[%s22] ss:$4 sm:$0xff]
  %vm24 = vcmask 261120
  %s25 = scalar_lea.vmem %s1, 16
  %26 = vst.msk [vmem:[%s25] ss:$8 sm:$0x3] %vm24, %v23
  %s27 = scalar_lea.vmem %s1, 1
  %28 = vst.msk [vmem:[%s27] ss:$8 sm:$0xc] %vm24, %v23
  %s29 = scalar_lea.vmem %s1, 4294967282
  %30 = vst.msk [vmem:[%s29] ss:$8 sm:$0x30] %vm24, %v23
  %s31 = scalar_lea.vmem %s1, 4294967267
  %32 = vst.msk [vmem:[%s31] ss:$8 sm:$0xc0] %vm24, %v23
  %s33 = scalar_lea.vmem %s0, 96
  %v34 = vld [vmem:[%s33] ss:$4 sm:$0xff]
  %vm35 = vcmask 261120
  %s36 = scalar_lea.vmem %s1, 20
  %37 = vst.msk [vmem:[%s36] ss:$8 sm:$0x3] %vm35, %v34
  %s38 = scalar_lea.vmem %s1, 5
  %39 = vst.msk [vmem:[%s38] ss:$8 sm:$0xc] %vm35, %v34
  %s40 = scalar_lea.vmem %s1, 4294967286
  %41 = vst.msk [vmem:[%s40] ss:$8 sm:$0x30] %vm35, %v34
  %s42 = scalar_lea.vmem %s1, 4294967271
  %43 = vst.msk [vmem:[%s42] ss:$8 sm:$0xc0] %vm35, %v34
  %s44 = scalar_lea.vmem %s0, 3
  %v45 = vld [vmem:[%s44] ss:$8 sm:$0xf]
  %s46 = scalar_lea.vmem %s0, 3
  %v47 = vld [vmem:[%s46] ss:$8 sm:$0xf0]
  %vm48 = vcmask 1047556
  %v49 = vsel %vm48, %v47, %v45
  %50 = vrot.lane.b32.xlu0 %v49, 96
  %v51 = vpop.permute.xlu0 %50
  %vm52 = vcmask 1048320
  %53 = vst.msk [vmem:[%s1] sm:$0xff] %vm52, %v51
  %s54 = scalar_lea.vmem %s0, 7
  %v55 = vld [vmem:[%s54] ss:$8 sm:$0xf]
  %s56 = scalar_lea.vmem %s0, 7
  %v57 = vld [vmem:[%s56] ss:$8 sm:$0xf0]
  %vm58 = vcmask 1047556
  %v59 = vsel %vm58, %v57, %v55
  %60 = vrot.lane.b32.xlu0 %v59, 96
  %v61 = vpop.permute.xlu0 %60
  %vm62 = vcmask 1048320
  %s63 = scalar_lea.vmem %s1, 8
  %64 = vst.msk [vmem:[%s63] sm:$0xff] %vm62, %v61
  %s65 = scalar_lea.vmem %s0, 67
  %v66 = vld [vmem:[%s65] ss:$8 sm:$0xf]
  %s67 = scalar_lea.vmem %s0, 67
  %v68 = vld [vmem:[%s67] ss:$8 sm:$0xf0]
  %vm69 = vcmask 1047556
  %v70 = vsel %vm69, %v68, %v66
  %71 = vrot.lane.b32.xlu0 %v70, 96
  %v72 = vpop.permute.xlu0 %71
  %vm73 = vcmask 1048320
  %s74 = scalar_lea.vmem %s1, 16
  %75 = vst.msk [vmem:[%s74] sm:$0xff] %vm73, %v72
  %s76 = scalar_lea.vmem %s0, 71
  %v77 = vld [vmem:[%s76] ss:$8 sm:$0xf]
  %s78 = scalar_lea.vmem %s0, 71
  %v79 = vld [vmem:[%s78] ss:$8 sm:$0xf0]
  %vm80 = vcmask 1047556
  %v81 = vsel %vm80, %v79, %v77
  %82 = vrot.lane.b32.xlu0 %v81, 96
  %v83 = vpop.permute.xlu0 %82
  %vm84 = vcmask 1048320
  %s85 = scalar_lea.vmem %s1, 24
  %86 = vst.msk [vmem:[%s85] sm:$0xff] %vm84, %v83
  %s87 = scalar_lea.vmem %s0, 2
  %v88 = vld [vmem:[%s87] ss:$8 sm:$0xf]
  %s89 = scalar_lea.vmem %s0, 2
  %v90 = vld [vmem:[%s89] ss:$8 sm:$0xf0]
  %vm91 = vcmask 1047556
  %v92 = vsel %vm91, %v90, %v88
  %93 = vrot.lane.b32.xlu0 %v92, 64
  %v94 = vpop.permute.xlu0 %93
  %vm95 = vcmask 785920
  %96 = vst.msk [vmem:[%s1] sm:$0xff] %vm95, %v94
  %s97 = scalar_lea.vmem %s0, 6
  %v98 = vld [vmem:[%s97] ss:$8 sm:$0xf]
  %s99 = scalar_lea.vmem %s0, 6
  %v100 = vld [vmem:[%s99] ss:$8 sm:$0xf0]
  %vm101 = vcmask 1047556
  %v102 = vsel %vm101, %v100, %v98
  %103 = vrot.lane.b32.xlu0 %v102, 64
  %v104 = vpop.permute.xlu0 %103
  %vm105 = vcmask 785920
  %s106 = scalar_lea.vmem %s1, 8
  %107 = vst.msk [vmem:[%s106] sm:$0xff] %vm105, %v104
  %s108 = scalar_lea.vmem %s0, 66
  %v109 = vld [vmem:[%s108] ss:$8 sm:$0xf]
  %s110 = scalar_lea.vmem %s0, 66
  %v111 = vld [vmem:[%s110] ss:$8 sm:$0xf0]
  %vm112 = vcmask 1047556
  %v113 = vsel %vm112, %v111, %v109
  %114 = vrot.lane.b32.xlu0 %v113, 64
  %v115 = vpop.permute.xlu0 %114
  %vm116 = vcmask 785920
  %s117 = scalar_lea.vmem %s1, 16
  %118 = vst.msk [vmem:[%s117] sm:$0xff] %vm116, %v115
  %s119 = scalar_lea.vmem %s0, 70
  %v120 = vld [vmem:[%s119] ss:$8 sm:$0xf]
  %s121 = scalar_lea.vmem %s0, 70
  %v122 = vld [vmem:[%s121] ss:$8 sm:$0xf0]
  %vm123 = vcmask 1047556
  %v124 = vsel %vm123, %v122, %v120
  %125 = vrot.lane.b32.xlu0 %v124, 64
  %v126 = vpop.permute.xlu0 %125
  %vm127 = vcmask 785920
  %s128 = scalar_lea.vmem %s1, 24
  %129 = vst.msk [vmem:[%s128] sm:$0xff] %vm127, %v126
  %s130 = scalar_lea.vmem %s0, 1
  %v131 = vld [vmem:[%s130] ss:$8 sm:$0xf]
  %s132 = scalar_lea.vmem %s0, 1
  %v133 = vld [vmem:[%s132] ss:$8 sm:$0xf0]
  %vm134 = vcmask 1047556
  %v135 = vsel %vm134, %v133, %v131
  %136 = vrot.lane.b32.xlu0 %v135, 32
  %v137 = vpop.permute.xlu0 %136
  %vm138 = vcmask 523520
  %139 = vst.msk [vmem:[%s1] sm:$0xff] %vm138, %v137
  %s140 = scalar_lea.vmem %s0, 5
  %v141 = vld [vmem:[%s140] ss:$8 sm:$0xf]
  %s142 = scalar_lea.vmem %s0, 5
  %v143 = vld [vmem:[%s142] ss:$8 sm:$0xf0]
  %vm144 = vcmask 1047556
  %v145 = vsel %vm144, %v143, %v141
  %146 = vrot.lane.b32.xlu0 %v145, 32
  %v147 = vpop.permute.xlu0 %146
  %vm148 = vcmask 523520
  %s149 = scalar_lea.vmem %s1, 8
  %150 = vst.msk [vmem:[%s149] sm:$0xff] %vm148, %v147
  %s151 = scalar_lea.vmem %s0, 65
  %v152 = vld [vmem:[%s151] ss:$8 sm:$0xf]
  %s153 = scalar_lea.vmem %s0, 65
  %v154 = vld [vmem:[%s153] ss:$8 sm:$0xf0]
  %vm155 = vcmask 1047556
  %v156 = vsel %vm155, %v154, %v152
  %157 = vrot.lane.b32.xlu0 %v156, 32
  %v158 = vpop.permute.xlu0 %157
  %vm159 = vcmask 523520
  %s160 = scalar_lea.vmem %s1, 16
  %161 = vst.msk [vmem:[%s160] sm:$0xff] %vm159, %v158
  %s162 = scalar_lea.vmem %s0, 69
  %v163 = vld [vmem:[%s162] ss:$8 sm:$0xf]
  %s164 = scalar_lea.vmem %s0, 69
  %v165 = vld [vmem:[%s164] ss:$8 sm:$0xf0]
  %vm166 = vcmask 1047556
  %v167 = vsel %vm166, %v165, %v163
  %168 = vrot.lane.b32.xlu0 %v167, 32
  %v169 = vpop.permute.xlu0 %168
  %vm170 = vcmask 523520
  %s171 = scalar_lea.vmem %s1, 24
  %172 = vst.msk [vmem:[%s171] sm:$0xff] %vm170, %v169

// kernel: linear_filter_classifier_forward.1
$region0: #{linear_filter_classifier_forward.1}
  #allocation0 [shape = 'u32[]', space=smem, size = 0x4, offset = 0x4, fixed_abs, tag = 'smem constant byte address 0x4 - core index']
  #allocation1 [shape = 'u32[144,128]{1,0:T(1,128)}', space=vmem, size = 0x12000, scoped, tag = 'internal scratch']
  %s0 = inlined_call_operand.vmem [shape: f32[16,256], index: 0, kind: input, shape index: {}]
  %s1 = inlined_call_operand.vmem [shape: f32[512,256], index: 1, kind: input, shape index: {}]
  %s2 = inlined_call_operand.vmem [shape: f32[16,256], index: 2, kind: output, shape index: {}]
  %s3 = sld [smem:[#allocation0]]
  $region41: #{linear_filter_classifier_forward.1} parent=0
    _
  %s5 = ssub.s32 1, %s3
  %s6 = scalar_select 0, %s5, %s3
  loop: start=0, step=1, limit=4
  $region2: #{linear_filter_classifier_forward.1} parent=0 // loop_pre_header
    _
  $region3: #{linear_filter_classifier_forward.1} parent=0 // loop_header
    %s8 = sphi 0, %s12
    %p9 = scmp.ge.s32.totalorder %s8, 4
    %s18 = sphi 0, %s20
    %s21 = sphi 0, %s18
    %s22 = sphi 0, %s21
    %s38 = sphi 0, %s22
    %s44 = sphi 0, %s46
    %s47 = sphi 0, %s44
    %s48 = sphi 0, %s47
    %s64 = sphi 0, %s48
    %s70 = sphi 0, %s72
    %s73 = sphi 0, %s70
    %s74 = sphi 0, %s73
    %s90 = sphi 0, %s74
  $region4: #{linear_filter_classifier_forward.1} parent=0 // loop_header_branch
    %11 = sbr.rel (%p9) target = $region8
  $region5: #{linear_filter_classifier_forward.1} parent=0 // loop_body
    %s13 = ssub.s32 %s8, 1
    %s14 = ssub.s32 %s8, 2
    %s15 = sadd.s32 %s8, 1
    %s16 = ssub.s32 %s8, %s15
    %p17 = scmp.eq.s32.totalorder %s16, 0
    %s19 = sadd.s32 %s18, 1
    %s20 = scalar_select %p17, %s18, %s19
    %p23 = pneg %p17
    %p24 = scmp.eq.s32.totalorder %s8, 1
    %p25 = por %p23, %p24
    %p26 = scmp.ne.s32.totalorder %s18, %s21
    %p27 = scmp.eq.s32.totalorder %s8, 0
    %p28 = por %p26, %p27
    %p29 = scmp.ne.s32.totalorder %s18, %s21
    %p30 = scmp.eq.s32.totalorder %s13, 1
    %p31 = por %p29, %p30
    %p32 = scmp.ne.s32.totalorder %s21, %s22
    %p33 = scmp.eq.s32.totalorder %s13, 0
    %p34 = por %p32, %p33
    %p35 = scmp.ne.s32.totalorder %s21, %s22
    %p36 = scmp.eq.s32.totalorder %s14, 1
    %p37 = por %p35, %p36
    %p39 = scmp.ne.s32.totalorder %s22, %s38
    %p40 = scmp.eq.s32.totalorder %s14, 0
    %p41 = por %p39, %p40
    %s42 = ssub.s32 %s8, %s15
    %p43 = scmp.eq.s32.totalorder %s42, 0
    %s45 = sadd.s32 %s44, 1
    %s46 = scalar_select %p43, %s44, %s45
    %p49 = pneg %p43
    %p50 = scmp.eq.s32.totalorder %s8, 1
    %p51 = por %p49, %p50
    %p52 = scmp.ne.s32.totalorder %s44, %s47
    %p53 = scmp.eq.s32.totalorder %s8, 0
    %p54 = por %p52, %p53
    %p55 = scmp.ne.s32.totalorder %s44, %s47
    %p56 = scmp.eq.s32.totalorder %s13, 1
    %p57 = por %p55, %p56
    %p58 = scmp.ne.s32.totalorder %s47, %s48
    %p59 = scmp.eq.s32.totalorder %s13, 0
    %p60 = por %p58, %p59
    %p61 = scmp.ne.s32.totalorder %s47, %s48
    %p62 = scmp.eq.s32.totalorder %s14, 1
    %p63 = por %p61, %p62
    %p65 = scmp.ne.s32.totalorder %s48, %s64
    %p66 = scmp.eq.s32.totalorder %s14, 0
    %p67 = por %p65, %p66
    %s68 = ssub.s32 %s8, %s15
    %p69 = scmp.eq.s32.totalorder %s68, 0
    %s71 = sadd.s32 %s70, 1
    %s72 = scalar_select %p69, %s70, %s71
    %p75 = pneg %p69
    %p76 = scmp.eq.s32.totalorder %s8, 1
    %p77 = por %p75, %p76
    %p78 = scmp.ne.s32.totalorder %s70, %s73
    %p79 = scmp.eq.s32.totalorder %s8, 0
    %p80 = por %p78, %p79
    %p81 = scmp.ne.s32.totalorder %s70, %s73
    %p82 = scmp.eq.s32.totalorder %s13, 1
    %p83 = por %p81, %p82
    %p84 = scmp.ne.s32.totalorder %s73, %s74
    %p85 = scmp.eq.s32.totalorder %s13, 0
    %p86 = por %p84, %p85
    %p87 = scmp.ne.s32.totalorder %s73, %s74
    %p88 = scmp.eq.s32.totalorder %s14, 1
    %p89 = por %p87, %p88
    %p91 = scmp.ne.s32.totalorder %s74, %s90
    %p92 = scmp.eq.s32.totalorder %s14, 0
    %p93 = por %p91, %p92
    %p94 = scmp.le.s32.totalorder 1, %s8
    %p95 = scmp.lt.s32.totalorder %s8, 3
    %p96 = pnand %p94, %p95
    %p97 = pneg %p96
    // Predicated region
    $region9: #{linear_filter_classifier_forward.1} parent=5 // pred_check
      _
    $region10: #{linear_filter_classifier_forward.1} parent=5 // pred_check_branch
      %99 = sbr.rel (%p96) target = $region12
    $region11: #{linear_filter_classifier_forward.1} parent=5 // pred_region
      %s100 = ssub.s32 %s8, 1
    $region12: #{linear_filter_classifier_forward.1} parent=5 // pred_fallthru
      _
    %p101 = scmp.lt.s32.totalorder %s8, 2
    // Predicated region
    $region13: #{linear_filter_classifier_forward.1} parent=5 // pred_check
      %p102 = pneg %p101
    $region14: #{linear_filter_classifier_forward.1} parent=5 // pred_check_branch
      %104 = sbr.rel (%p102) target = $region16
    $region15: #{linear_filter_classifier_forward.1} parent=5 // pred_region
      // Predicated region
      $region17: #{linear_filter_classifier_forward.1} parent=15 // pred_check
        %p105 = pneg %p28
      $region18: #{linear_filter_classifier_forward.1} parent=15 // pred_check_branch
        %107 = sbr.rel (%p105) target = $region20
      $region19: #{linear_filter_classifier_forward.1} parent=15 // pred_region
        %p108 = scmp.lt.s32.totalorder %s8, 1
        %s109 = scalar_select %p108, %s8, 1
        %s110 = smul.addr %s109, 2
        %s111 = smul.addr %s110, 8
        %s112 = scalar_lea.vmem %s0, %s111
      $region20: #{linear_filter_classifier_forward.1} parent=15 // pred_fallthru
        _
      // Predicated region
      $region21: #{linear_filter_classifier_forward.1} parent=15 // pred_check
        %p113 = pneg %p54
      $region22: #{linear_filter_classifier_forward.1} parent=15 // pred_check_branch
        %115 = sbr.rel (%p113) target = $region24
      $region23: #{linear_filter_classifier_forward.1} parent=15 // pred_region
        %s116 = smul.u32 32, %s8
        %p117 = scmp.lt.s32.totalorder %s116, 63
        %s118 = scalar_select %p117, %s116, 63
        %s119 = smul.addr %s118, 2
        %s120 = smul.addr %s119, 8
        %s121 = scalar_lea.vmem %s1, %s120
        %s122 = smul.u32 32, %s8
      $region24: #{linear_filter_classifier_forward.1} parent=15 // pred_fallthru
        _
    $region16: #{linear_filter_classifier_forward.1} parent=5 // pred_fallthru
      _
    %p123 = scmp.le.s32.totalorder 1, %s8
    %p124 = scmp.lt.s32.totalorder %s8, 3
    %p125 = pnand %p123, %p124
    %p126 = pneg %p125
    // Predicated region
    $region25: #{linear_filter_classifier_forward.1} parent=5 // pred_check
      _
    $region26: #{linear_filter_classifier_forward.1} parent=5 // pred_check_branch
      %128 = sbr.rel (%p125) target = $region28
    $region27: #{linear_filter_classifier_forward.1} parent=5 // pred_region
      %s129 = ssub.s32 %s8, 1
      %p130 = scmp.lt.s32.totalorder %s13, 1
      %s131 = scalar_select %p130, %s13, 1
      %s132 = smul.addr %s131, 2
      %s133 = smul.addr %s132, 8
      %s134 = scalar_lea.vmem %s0, %s133
      %p135 = pneg %p34
      %p136 = pneg %p31
      %s137 = smul.u32 32, %s13
      %p138 = scmp.lt.s32.totalorder %s137, 63
      %s139 = scalar_select %p138, %s137, 63
      %s140 = smul.addr %s139, 2
      %s141 = smul.addr %s140, 8
      %s142 = scalar_lea.vmem %s1, %s141
      %p143 = pneg %p60
      %p144 = pneg %p57
      %p145 = pneg %p86
      %p146 = pneg %p83
      %p147 = scmp.lt.s32.totalorder %s13, 1
      %s148 = scalar_select %p147, %s13, 1
      %s149 = smul.addr %s148, 2
      %s150 = smul.addr %s149, 8
      %s151 = scalar_lea.vmem %s2, %s150
      %p152 = scmp.lt.s32.totalorder %s13, 1
      %s153 = scalar_select %p152, %s13, 1
      %s154 = smul.addr %s153, 2
      %s155 = smul.addr %s154, 8
      %s156 = scalar_lea.vmem %s0, %s155
      %s157 = smul.u32 32, %s13
      %p158 = scmp.lt.s32.totalorder %s157, 63
      %s159 = scalar_select %p158, %s157, 63
      %s160 = smul.addr %s159, 2
      %s161 = smul.addr %s160, 8
      %s162 = scalar_lea.vmem %s1, %s161
      %s163 = smul.u32 32, %s13
      %p164 = scmp.lt.s32.totalorder %s13, 1
      %s165 = scalar_select %p164, %s13, 1
      %s166 = smul.addr %s165, 2
      %s167 = smul.addr %s166, 8
      %s168 = scalar_lea.vmem %s2, %s167
      %v169 = vld [vmem:[%s156] sm:$0xff]
      %v170 = vld [vmem:[%s156 + $0x8] sm:$0xff]
      %v171 = vld [vmem:[%s162] sm:$0xff]
      %v172 = vld [vmem:[%s162 + $0x8] sm:$0xff]
      %v173 = vld [vmem:[%s162 + $0x10] sm:$0xff]
      %v174 = vld [vmem:[%s162 + $0x18] sm:$0xff]
      %v175 = vld [vmem:[%s162 + $0x20] sm:$0xff]
      %v176 = vld [vmem:[%s162 + $0x28] sm:$0xff]
      %v177 = vld [vmem:[%s162 + $0x30] sm:$0xff]
      %v178 = vld [vmem:[%s162 + $0x38] sm:$0xff]
      %v179 = vld [vmem:[%s162 + $0x40] sm:$0xff]
      %v180 = vld [vmem:[%s162 + $0x48] sm:$0xff]
      %v181 = vld [vmem:[%s162 + $0x50] sm:$0xff]
      %v182 = vld [vmem:[%s162 + $0x58] sm:$0xff]
      %v183 = vld [vmem:[%s162 + $0x60] sm:$0xff]
      %v184 = vld [vmem:[%s162 + $0x68] sm:$0xff]
      %v185 = vld [vmem:[%s162 + $0x70] sm:$0xff]
      %v186 = vld [vmem:[%s162 + $0x78] sm:$0xff]
      %v187 = vld [vmem:[%s162 + $0x80] sm:$0xff]
      %v188 = vld [vmem:[%s162 + $0x88] sm:$0xff]
      %v189 = vld [vmem:[%s162 + $0x90] sm:$0xff]
      %v190 = vld [vmem:[%s162 + $0x98] sm:$0xff]
      %v191 = vld [vmem:[%s162 + $0xa0] sm:$0xff]
      %v192 = vld [vmem:[%s162 + $0xa8] sm:$0xff]
      %v193 = vld [vmem:[%s162 + $0xb0] sm:$0xff]
      %v194 = vld [vmem:[%s162 + $0xb8] sm:$0xff]
      %v195 = vld [vmem:[%s162 + $0xc0] sm:$0xff]
      %v196 = vld [vmem:[%s162 + $0xc8] sm:$0xff]
      %v197 = vld [vmem:[%s162 + $0xd0] sm:$0xff]
      %v198 = vld [vmem:[%s162 + $0xd8] sm:$0xff]
      %v199 = vld [vmem:[%s162 + $0xe0] sm:$0xff]
      %v200 = vld [vmem:[%s162 + $0xe8] sm:$0xff]
      %v201 = vld [vmem:[%s162 + $0xf0] sm:$0xff]
      %v202 = vld [vmem:[%s162 + $0xf8] sm:$0xff]
      %v203 = vld [vmem:[%s162 + $0x100] sm:$0xff]
      %v204 = vld [vmem:[%s162 + $0x108] sm:$0xff]
      %v205 = vld [vmem:[%s162 + $0x110] sm:$0xff]
      %v206 = vld [vmem:[%s162 + $0x118] sm:$0xff]
      %v207 = vld [vmem:[%s162 + $0x120] sm:$0xff]
      %v208 = vld [vmem:[%s162 + $0x128] sm:$0xff]
      %v209 = vld [vmem:[%s162 + $0x130] sm:$0xff]
      %v210 = vld [vmem:[%s162 + $0x138] sm:$0xff]
      %v211 = vld [vmem:[%s162 + $0x140] sm:$0xff]
      %v212 = vld [vmem:[%s162 + $0x148] sm:$0xff]
      %v213 = vld [vmem:[%s162 + $0x150] sm:$0xff]
      %v214 = vld [vmem:[%s162 + $0x158] sm:$0xff]
      %v215 = vld [vmem:[%s162 + $0x160] sm:$0xff]
      %v216 = vld [vmem:[%s162 + $0x168] sm:$0xff]
      %v217 = vld [vmem:[%s162 + $0x170] sm:$0xff]
      %v218 = vld [vmem:[%s162 + $0x178] sm:$0xff]
      %v219 = vld [vmem:[%s162 + $0x180] sm:$0xff]
      %v220 = vld [vmem:[%s162 + $0x188] sm:$0xff]
      %v221 = vld [vmem:[%s162 + $0x190] sm:$0xff]
      %v222 = vld [vmem:[%s162 + $0x198] sm:$0xff]
      %v223 = vld [vmem:[%s162 + $0x1a0] sm:$0xff]
      %v224 = vld [vmem:[%s162 + $0x1a8] sm:$0xff]
      %v225 = vld [vmem:[%s162 + $0x1b0] sm:$0xff]
      %v226 = vld [vmem:[%s162 + $0x1b8] sm:$0xff]
      %v227 = vld [vmem:[%s162 + $0x1c0] sm:$0xff]
      %v228 = vld [vmem:[%s162 + $0x1c8] sm:$0xff]
      %v229 = vld [vmem:[%s162 + $0x1d0] sm:$0xff]
      %v230 = vld [vmem:[%s162 + $0x1d8] sm:$0xff]
      %v231 = vld [vmem:[%s162 + $0x1e0] sm:$0xff]
      %v232 = vld [vmem:[%s162 + $0x1e8] sm:$0xff]
      %v233 = vld [vmem:[%s162 + $0x1f0] sm:$0xff]
      %v234 = vld [vmem:[%s162 + $0x1f8] sm:$0xff]
      %235 = vmatprep.subr.mxu0 %v172
      %236 = vmatpush1.msra.mxu0 %v171
      %237 = vmatprep.subr.mxu0 %v174
      %238 = vmatpush1.msra.mxu0 %v173
      %239 = vmatprep.subr.mxu0 %v176
      %240 = vmatpush1.msra.mxu0 %v175
      %241 = vmatprep.subr.mxu0 %v178
      %242 = vmatpush1.msra.mxu0 %v177
      %243 = vmatprep.subr.mxu0 %v180
      %244 = vmatpush1.msra.mxu0 %v179
      %245 = vmatprep.subr.mxu0 %v182
      %246 = vmatpush1.msra.mxu0 %v181
      %247 = vmatprep.subr.mxu0 %v184
      %248 = vmatpush1.msra.mxu0 %v183
      %249 = vmatprep.subr.mxu0 %v186
      %250 = vmatpush1.msra.mxu0 %v185
      %251 = vmatprep.subr.mxu0 %v188
      %252 = vmatpush1.msra.mxu0 %v187
      %253 = vmatprep.subr.mxu0 %v190
      %254 = vmatpush1.msra.mxu0 %v189
      %255 = vmatprep.subr.mxu0 %v192
      %256 = vmatpush1.msra.mxu0 %v191
      %257 = vmatprep.subr.mxu0 %v194
      %258 = vmatpush1.msra.mxu0 %v193
      %259 = vmatprep.subr.mxu0 %v196
      %260 = vmatpush1.msra.mxu0 %v195
      %261 = vmatprep.subr.mxu0 %v198
      %262 = vmatpush1.msra.mxu0 %v197
      %263 = vmatprep.subr.mxu0 %v200
      %264 = vmatpush1.msra.mxu0 %v199
      %265 = vmatprep.subr.mxu0 %v202
      %266 = vmatpush1.msra.mxu0 %v201
      %267 = vmatprep.subr.mxu0 %v204
      %268 = vmatpush1.msra.mxu0 %v203
      %269 = vmatprep.subr.mxu0 %v206
      %270 = vmatpush1.msra.mxu0 %v205
      %271 = vmatprep.subr.mxu0 %v208
      %272 = vmatpush1.msra.mxu0 %v207
      %273 = vmatprep.subr.mxu0 %v210
      %274 = vmatpush1.msra.mxu0 %v209
      %275 = vmatprep.subr.mxu0 %v212
      %276 = vmatpush1.msra.mxu0 %v211
      %277 = vmatprep.subr.mxu0 %v214
      %278 = vmatpush1.msra.mxu0 %v213
      %279 = vmatprep.subr.mxu0 %v216
      %280 = vmatpush1.msra.mxu0 %v215
      %281 = vmatprep.subr.mxu0 %v218
      %282 = vmatpush1.msra.mxu0 %v217
      %283 = vmatprep.subr.mxu0 %v220
      %284 = vmatpush1.msra.mxu0 %v219
      %285 = vmatprep.subr.mxu0 %v222
      %286 = vmatpush1.msra.mxu0 %v221
      %287 = vmatprep.subr.mxu0 %v224
      %288 = vmatpush1.msra.mxu0 %v223
      %289 = vmatprep.subr.mxu0 %v226
      %290 = vmatpush1.msra.mxu0 %v225
      %291 = vmatprep.subr.mxu0 %v228
      %292 = vmatpush1.msra.mxu0 %v227
      %293 = vmatprep.subr.mxu0 %v230
      %294 = vmatpush1.msra.mxu0 %v229
      %295 = vmatprep.subr.mxu0 %v232
      %296 = vmatpush1.msra.mxu0 %v231
      %297 = vmatprep.subr.mxu0 %v234
      %298 = vmatpush1.msra.mxu0 %v233
      %299 = vmatprep.mubr.f32.mxu0 %v170
      %300 = vmatmul.mubr.f32.gmra.mrb[0].mxu0 %v169
      %v301 = vpop.f32.mrb[0].mxu0
      %v302 = vadd.f32 0.0, %v301
      %v303 = vpop.f32.mrb[0].mxu0
      %v304 = vadd.f32 0.0, %v303
      %305 = vdwg.mxu0
      %306 = vst [vmem:[%s168] sm:$0xff] %v302
      %307 = vst [vmem:[%s168 + $0x8] sm:$0xff] %v304
      %p308 = scmp.lt.s32.totalorder %s13, 1
      %s309 = scalar_select %p308, %s13, 1
      %s310 = smul.addr %s309, 2
      %s311 = smul.addr %s310, 8
      %s312 = scalar_lea.vmem %s2, %s311
      // Predicated region
      $region29: #{linear_filter_classifier_forward.1} parent=27 // pred_check
        %p313 = pneg %p83
      $region30: #{linear_filter_classifier_forward.1} parent=27 // pred_check_branch
        %315 = sbr.rel (%p313) target = $region32
      $region31: #{linear_filter_classifier_forward.1} parent=27 // pred_region
        _
      $region32: #{linear_filter_classifier_forward.1} parent=27 // pred_fallthru
        _
    $region28: #{linear_filter_classifier_forward.1} parent=5 // pred_fallthru
      _
    %p316 = scmp.le.s32.totalorder 2, %s8
    // Predicated region
    $region33: #{linear_filter_classifier_forward.1} parent=5 // pred_check
      %p317 = pneg %p316
    $region34: #{linear_filter_classifier_forward.1} parent=5 // pred_check_branch
      %319 = sbr.rel (%p317) target = $region36
    $region35: #{linear_filter_classifier_forward.1} parent=5 // pred_region
      %s320 = ssub.s32 %s8, 2
      // Predicated region
      $region37: #{linear_filter_classifier_forward.1} parent=35 // pred_check
        %p321 = pneg %p89
      $region38: #{linear_filter_classifier_forward.1} parent=35 // pred_check_branch
        %323 = sbr.rel (%p321) target = $region40
      $region39: #{linear_filter_classifier_forward.1} parent=35 // pred_region
        %p324 = scmp.lt.s32.totalorder %s14, 1
        %s325 = scalar_select %p324, %s14, 1
        %s326 = smul.addr %s325, 2
        %s327 = smul.addr %s326, 8
        %s328 = scalar_lea.vmem %s2, %s327
      $region40: #{linear_filter_classifier_forward.1} parent=35 // pred_fallthru
        _
    $region36: #{linear_filter_classifier_forward.1} parent=5 // pred_fallthru
      _
  $region6: #{linear_filter_classifier_forward.1} parent=0 // loop_footer
    %s12 = sadd.s32 1, %s8
  $region7: #{linear_filter_classifier_forward.1} parent=0 // loop_footer_branch
    %7 = sbr.rel target = $region3
  $region8: #{linear_filter_classifier_forward.1} parent=0 // loop_exit
    _

</llo_original>
